<compile_context>
chip_gen: v5e
topology: v5e:2x2
jax: 0.10.0
libtpu: 0.0.40
codegen_flags: <defaults>
</compile_context>

<pallas_src>
import functools

import jax
import jax.numpy as jnp
from jax import lax
from jax.experimental import pallas as pl
from jax.experimental.pallas import tpu as pltpu


_LANES = 512                            # chunk width / lane-wide accumulator width
_PASS1_BLOCK_BYTES = 8 * 1024 * 1024    # pooling pass streams one input -> big tiles
_PASS2_BLOCK_BYTES = 4 * 1024 * 1024    # scaling pass streams in + out -> smaller tiles


def _vmem_budget_bytes():
    """Generation-aware usable scoped-VMEM budget (v7x only has 64 MiB)."""
    cap = 64 * 1024 * 1024                                   # conservative default
    try:
        cap = int(getattr(pltpu.get_tpu_info(), "vmem_capacity_bytes", cap))
    except Exception:
        pass
    if cap >= 96 * 1024 * 1024:                              # v5e / v6e class (128 MiB)
        return 96 * 1024 * 1024
    return max(32 * 1024 * 1024, (cap * 3) // 4)             # v7x class: 64 -> 48 MiB


def _pick_spatial_tile(hw, c, itemsize, target_bytes):
    """Largest multiple-of-_LANES spatial tile keeping a (1, C, tile) block under
    target_bytes (never below _LANES, never above the _LANES-padded extent)."""
    per_lane = max(1, c * itemsize)
    t = max(_LANES, (target_bytes // per_lane) // _LANES * _LANES)
    hw_pad = ((hw + _LANES - 1) // _LANES) * _LANES
    return min(t, hw_pad)


# --------------------------------------------------------------------------- #
# Fused single-pass channel attention: pool -> tiny MLP -> scale, one batch
# element per grid step, plane resident in VMEM (x read from HBM exactly once).
# --------------------------------------------------------------------------- #
def _fused_ca_kernel(x_ref, w1t_ref, b1_ref, w2_ref, b2_ref, o_ref,
                     sum_sc, max_sc, *, hw):
    n_full = hw // _LANES
    rem = hw - n_full * _LANES

    # lane-wide f32 accumulators: per-chunk work stays on the VPU, one
    # cross-lane reduce at the end (review: lane-wide accumulation).
    sum_sc[...] = jnp.zeros_like(sum_sc)
    max_sc[...] = jnp.full_like(max_sc, -jnp.inf)

    if n_full:
        @pl.loop(0, n_full)
        def _accumulate(j):
            off = pl.multiple_of(j * _LANES, _LANES)
            xc = x_ref[0, :, pl.ds(off, _LANES)].astype(jnp.float32)   # (C, _LANES)
            sum_sc[...] += xc
            max_sc[...] = jnp.maximum(max_sc[...], xc)

    sum_c = jnp.sum(sum_sc[...], axis=-1, keepdims=True)               # (C, 1)
    max_c = jnp.max(max_sc[...], axis=-1, keepdims=True)               # (C, 1)
    if rem:                                                            # static tail
        tail = x_ref[0, :, pl.ds(n_full * _LANES, rem)].astype(jnp.float32)
        sum_c = sum_c + jnp.sum(tail, axis=-1, keepdims=True)
        max_c = jnp.maximum(max_c, jnp.max(tail, axis=-1, keepdims=True))
    avg_c = sum_c * (1.0 / hw)

    # Tiny shared MLP as broadcast-multiply + reduce: exact f32 on VPU/XLU,
    # no MXU padding, no activation transposes (O(C*I) FLOPs = noise).
    w1t = w1t_ref[...].astype(jnp.float32)    # (C, I)  fc1 weight, transposed
    b1 = b1_ref[...].astype(jnp.float32)      # (1, I)
    w2 = w2_ref[...].astype(jnp.float32)      # (C, I)  fc2 weight
    b2 = b2_ref[...].astype(jnp.float32)      # (C, 1)

    def _mlp(p):                              # p: (C, 1) -> (C, 1)
        h = jnp.sum(w1t * p, axis=0, keepdims=True) + b1     # fc1  -> (1, I)
        h = jnp.maximum(h, 0.0)                               # relu
        s = jnp.sum(w2 * h, axis=1, keepdims=True) + b2       # fc2  -> (C, 1)
        return jax.nn.sigmoid(s)

    scale = _mlp(avg_c) + _mlp(max_c)                         # (C, 1)
    scale_row = jnp.broadcast_to(scale, sum_sc.shape)          # hoisted lane broadcast

    if n_full:
        @pl.loop(0, n_full)
        def _apply(j):
            off = pl.multiple_of(j * _LANES, _LANES)
            xc = x_ref[0, :, pl.ds(off, _LANES)].astype(jnp.float32)
            o_ref[0, :, pl.ds(off, _LANES)] = (xc * scale_row).astype(o_ref.dtype)
    if rem:
        off = n_full * _LANES
        tail = x_ref[0, :, pl.ds(off, rem)].astype(jnp.float32)
        o_ref[0, :, pl.ds(off, rem)] = (tail * scale).astype(o_ref.dtype)


# --------------------------------------------------------------------------- #
# Streaming fallback, Pass 1: tiled avg/max pooling with lane-wide accumulators
# and an optional 2-way split of the spatial reduction (B == 1 on v7x).
# --------------------------------------------------------------------------- #
def _pool_stats_kernel(x_ref, sum_ref, max_ref, sum_sc, max_sc,
                       *, hw, tile, tiles_per_split, needs_mask):
    s = pl.program_id(1)
    t = pl.program_id(2)

    @pl.when(t == 0)
    def _init():
        sum_sc[...] = jnp.zeros_like(sum_sc)
        max_sc[...] = jnp.full_like(max_sc, -jnp.inf)

    tile_start = (s * tiles_per_split + t) * tile

    @pl.loop(0, tile // _LANES)
    def _accumulate(j):
        off = pl.multiple_of(j * _LANES, _LANES)
        xc = x_ref[0, :, pl.ds(off, _LANES)].astype(jnp.float32)       # (C, _LANES)
        if needs_mask:                                                  # static flag
            lane = lax.broadcasted_iota(jnp.int32, xc.shape, 1)
            ok = (tile_start + off + lane) < hw
            sum_sc[...] += jnp.where(ok, xc, 0.0)
            max_sc[...] = jnp.maximum(max_sc[...], jnp.where(ok, xc, -jnp.inf))
        else:
            sum_sc[...] += xc
            max_sc[...] = jnp.maximum(max_sc[...], xc)

    @pl.when(t == pl.num_programs(2) - 1)
    def _finalize():
        sum_ref[...] = jnp.sum(sum_sc[...], axis=-1, keepdims=True)[None, None]
        max_ref[...] = jnp.max(max_sc[...], axis=-1, keepdims=True)[None, None]


# --------------------------------------------------------------------------- #
# Streaming fallback, Pass 2: lane-dense elementwise scaling.
# --------------------------------------------------------------------------- #
def _apply_scale_kernel(x_ref, s_ref, o_ref):
    sc = s_ref[0]                                  # (C, _LANES) f32, loaded once/tile

    @pl.loop(0, x_ref.shape[-1] // _LANES)
    def _apply(j):
        off = pl.multiple_of(j * _LANES, _LANES)
        xc = x_ref[0, :, pl.ds(off, _LANES)].astype(jnp.float32)
        o_ref[0, :, pl.ds(off, _LANES)] = (xc * sc).astype(o_ref.dtype)


def cpca_channel_attention(x, w1, b1, w2, b2, *, force_streaming=False):
    """CPCA_ChannelAttention forward.

    x:  (B, C, H, W) float32 / bfloat16
    w1: (I, C), b1: (I,)   fc1 (1x1 conv C->I), squeezed
    w2: (C, I), b2: (C,)   fc2 (1x1 conv I->C), squeezed
    Returns (B, C, H, W) in x.dtype.
    """
    B, C, H, W = x.shape
    HW = H * W
    I = w1.shape[0]
    x_flat = x.reshape(B, C, HW)
    budget = _vmem_budget_bytes()

    # ---------------- fused path: 2x plane traffic instead of 3x ----------------
    plane_bytes = C * HW * x.dtype.itemsize
    fused_bytes = 4 * plane_bytes + 2 * C * _LANES * 4 + (1 << 20)   # in+out dbl buffers
    if (not force_streaming) and fused_bytes <= budget:
        out_flat = pl.pallas_call(
            functools.partial(_fused_ca_kernel, hw=HW),
            out_shape=jax.ShapeDtypeStruct((B, C, HW), x.dtype),
            grid_spec=pltpu.PrefetchScalarGridSpec(
                num_scalar_prefetch=0,
                grid=(B,),
                in_specs=[
                    pl.BlockSpec((1, C, HW), lambda b: (b, 0, 0)),     # x plane
                    pl.BlockSpec((C, I), lambda b: (0, 0)),            # fc1 weight^T
                    pl.BlockSpec((1, I), lambda b: (0, 0)),            # fc1 bias
                    pl.BlockSpec((C, I), lambda b: (0, 0)),            # fc2 weight
                    pl.BlockSpec((C, 1), lambda b: (0, 0)),            # fc2 bias
                ],
                out_specs=pl.BlockSpec((1, C, HW), lambda b: (b, 0, 0)),
                scratch_shapes=[pltpu.VMEM((C, _LANES), jnp.float32),
                                pltpu.VMEM((C, _LANES), jnp.float32)]),
            compiler_params=pltpu.CompilerParams(
                dimension_semantics=("parallel",),
                vmem_limit_bytes=budget),
        )(x_flat,
          w1.astype(jnp.float32).T,
          b1.astype(jnp.float32).reshape(1, I),
          w2.astype(jnp.float32),
          b2.astype(jnp.float32).reshape(C, 1))
        return out_flat.reshape(B, C, H, W)

    # ---------------- streaming fallback: Pass 1 (pooling) ----------------
    tile1 = _pick_spatial_tile(HW, C, x.dtype.itemsize, _PASS1_BLOCK_BYTES)
    n_tiles1 = pl.cdiv(HW, tile1)
    # 2-way split of the reduction when batch alone can't feed both v7x cores
    # (harmless on single-core v5e/v6e; partials combined below).
    splits = 2 if (B == 1 and n_tiles1 >= 2 and n_tiles1 % 2 == 0) else 1
    tps = n_tiles1 // splits
    needs_mask = (HW % tile1) != 0

    sum_part, max_part = pl.pallas_call(
        functools.partial(_pool_stats_kernel, hw=HW, tile=tile1,
                          tiles_per_split=tps, needs_mask=needs_mask),
        out_shape=(jax.ShapeDtypeStruct((B, splits, C, 1), jnp.float32),
                   jax.ShapeDtypeStruct((B, splits, C, 1), jnp.float32)),
        grid_spec=pltpu.PrefetchScalarGridSpec(
            num_scalar_prefetch=0,
            grid=(B, splits, tps),
            in_specs=[pl.BlockSpec((1, C, tile1),
                                   lambda b, s, t: (b, 0, s * tps + t))],
            out_specs=(pl.BlockSpec((1, 1, C, 1), lambda b, s, t: (b, s, 0, 0)),
                       pl.BlockSpec((1, 1, C, 1), lambda b, s, t: (b, s, 0, 0))),
            scratch_shapes=[pltpu.VMEM((C, _LANES), jnp.float32),
                            pltpu.VMEM((C, _LANES), jnp.float32)]),
        compiler_params=pltpu.CompilerParams(
            dimension_semantics=("parallel", "parallel", "arbitrary"),
            vmem_limit_bytes=budget),
    )(x_flat)

    # ---------------- tiny shared MLP, hoisted out of the hot kernels ----------------
    hp = lax.Precision.HIGHEST
    avg = jnp.sum(sum_part, axis=1)[..., 0] / jnp.float32(HW)           # (B, C)
    mx = jnp.max(max_part, axis=1)[..., 0]                              # (B, C)
    pooled = jnp.concatenate([avg, mx], axis=0)                         # (2B, C)
    h = jnp.maximum(jnp.dot(pooled, w1.astype(jnp.float32).T, precision=hp)
                    + b1.astype(jnp.float32), 0.0)
    s = jax.nn.sigmoid(jnp.dot(h, w2.astype(jnp.float32).T, precision=hp)
                       + b2.astype(jnp.float32))
    scale = s[:B] + s[B:]                                               # (B, C)
    # pre-broadcast to a lane-dense operand for Pass 2 (review item 7)
    scale_b = jnp.broadcast_to(scale[:, :, None], (B, C, _LANES)).astype(jnp.float32)

    # ---------------- streaming fallback: Pass 2 (x * scale) ----------------
    tile2 = _pick_spatial_tile(HW, C, x.dtype.itemsize, _PASS2_BLOCK_BYTES)
    n_tiles2 = pl.cdiv(HW, tile2)
    out_flat = pl.pallas_call(
        _apply_scale_kernel,
        out_shape=jax.ShapeDtypeStruct((B, C, HW), x.dtype),
        grid_spec=pltpu.PrefetchScalarGridSpec(
            num_scalar_prefetch=0,
            grid=(B, n_tiles2),
            in_specs=[pl.BlockSpec((1, C, tile2), lambda b, t: (b, 0, t)),
                      pl.BlockSpec((1, C, _LANES), lambda b, t: (b, 0, 0))],
            out_specs=pl.BlockSpec((1, C, tile2), lambda b, t: (b, 0, t))),
        compiler_params=pltpu.CompilerParams(
            dimension_semantics=("parallel", "parallel"),
            vmem_limit_bytes=budget),
    )(x_flat, scale_b)
    return out_flat.reshape(B, C, H, W)


# --------------------------------------------------------------------------- #
# Full CPCA block.
# TODO(synk): the 1x1 conv, GELU and the depthwise 5x5/1xK/Kx1 convolutions are
# left to XLA (lax.conv_general_dilated); only the memory-bound channel
# attention is hand-written in Pallas.
# --------------------------------------------------------------------------- #
def _conv2d(x, w, b, padding, groups):
    out = lax.conv_general_dilated(
        x, w, window_strides=(1, 1), padding=padding,
        dimension_numbers=("NCHW", "OIHW", "NCHW"),
        feature_group_count=groups,
        precision=lax.Precision.HIGHEST)
    return out + b[None, :, None, None]


def ca_reference(x, w1, b1, w2, b2):
    """Pure-JAX CPCA_ChannelAttention (mirrors the PyTorch forward)."""
    hp = lax.Precision.HIGHEST
    avg = jnp.mean(x, axis=(2, 3))
    mx = jnp.max(x, axis=(2, 3))

    def mlp(p):
        h = jnp.maximum(jnp.dot(p, w1.T, precision=hp) + b1, 0.0)
        return jax.nn.sigmoid(jnp.dot(h, w2.T, precision=hp) + b2)

    scale = mlp(avg) + mlp(mx)
    return x * scale[:, :, None, None]


def _cpca_forward_impl(x, p, ca_fn):
    """CPCA.forward with a pluggable channel-attention implementation."""
    C = x.shape[1]
    conv1x1 = lambda t: _conv2d(t, p["conv_w"], p["conv_b"], [(0, 0), (0, 0)], 1)
    inputs = jax.nn.gelu(conv1x1(x), approximate=False)          # conv + GELU
    inputs = ca_fn(inputs, p["fc1_w"], p["fc1_b"], p["fc2_w"], p["fc2_b"])
    x_init = _conv2d(inputs, p["d5x5_w"], p["d5x5_b"], [(2, 2), (2, 2)], C)
    x_1 = _conv2d(x_init, p["d1x7_w"], p["d1x7_b"], [(0, 0), (3, 3)], C)
    x_1 = _conv2d(x_1, p["d7x1_w"], p["d7x1_b"], [(3, 3), (0, 0)], C)
    x_2 = _conv2d(x_init, p["d1x11_w"], p["d1x11_b"], [(0, 0), (5, 5)], C)
    x_2 = _conv2d(x_2, p["d11x1_w"], p["d11x1_b"], [(5, 5), (0, 0)], C)
    x_3 = _conv2d(x_init, p["d1x21_w"], p["d1x21_b"], [(0, 0), (10, 10)], C)
    x_3 = _conv2d(x_3, p["d21x1_w"], p["d21x1_b"], [(10, 10), (0, 0)], C)
    x_sum = x_1 + x_2 + x_3 + x_init
    spatial_att = conv1x1(x_sum)
    out = spatial_att * inputs
    return conv1x1(out)


def cpca_forward(x, params):
    return _cpca_forward_impl(x, params, cpca_channel_attention)


def cpca_reference(x, params):
    return _cpca_forward_impl(x, params, ca_reference)


if __name__ == "__main__":
    key = jax.random.PRNGKey(0)
    B, C, H, W = 2, 8, 16, 16
    reduce_ratio = 4
    I = C // reduce_ratio

    keys = jax.random.split(key, 32)
    kit = iter(keys)

    def rnd(shape, s=0.1):
        return jax.random.normal(next(kit), shape, dtype=jnp.float32) * s

    params = {
        "conv_w": rnd((C, C, 1, 1)), "conv_b": rnd((C,)),
        "fc1_w": rnd((I, C)), "fc1_b": rnd((I,)),
        "fc2_w": rnd((C, I)), "fc2_b": rnd((C,)),
        "d5x5_w": rnd((C, 1, 5, 5)), "d5x5_b": rnd((C,)),
        "d1x7_w": rnd((C, 1, 1, 7)), "d1x7_b": rnd((C,)),
        "d7x1_w": rnd((C, 1, 7, 1)), "d7x1_b": rnd((C,)),
        "d1x11_w": rnd((C, 1, 1, 11)), "d1x11_b": rnd((C,)),
        "d11x1_w": rnd((C, 1, 11, 1)), "d11x1_b": rnd((C,)),
        "d1x21_w": rnd((C, 1, 1, 21)), "d1x21_b": rnd((C,)),
        "d21x1_w": rnd((C, 1, 21, 1)), "d21x1_b": rnd((C,)),
    }
    x = jax.random.normal(next(kit), (B, C, H, W), dtype=jnp.float32)

    # Channel-attention kernel self-checks: fused path, streaming fallback and
    # the split-reduction streaming path (B == 1, multiple spatial tiles).
    x_big = jax.random.normal(next(kit), (1, C, 1024, 1024), dtype=jnp.float32)
    ca_cases = [("fused", x, False), ("streaming", x, True),
                ("streaming-split", x_big, True)]
    for name, xc, force in ca_cases:
        got = jax.block_until_ready(
            cpca_channel_attention(xc, params["fc1_w"], params["fc1_b"],
                                   params["fc2_w"], params["fc2_b"],
                                   force_streaming=force))
        want = ca_reference(xc, params["fc1_w"], params["fc1_b"],
                            params["fc2_w"], params["fc2_b"])
        assert jnp.allclose(got, want, atol=1e-4, rtol=1e-4), f"CA mismatch ({name})"

    # Full CPCA forward (Pallas channel attention + XLA convs) vs pure-JAX ref.
    out = jax.block_until_ready(cpca_forward(x, params))
    ref = cpca_reference(x, params)
    assert jnp.allclose(out, ref, atol=1e-4, rtol=1e-4), "CPCA mismatch vs reference"

    print("KERNEL_OK")
</pallas_src>

<mosaic_0001>
module attributes {stable_mosaic.version = 11 : i64} {
  func.func @_fused_ca_kernel(%arg0: i32, %arg1: memref<1x8x256xf32, #tpu.memory_space<vmem>>, %arg2: memref<8x2xf32, #tpu.memory_space<vmem>>, %arg3: memref<1x2xf32, #tpu.memory_space<vmem>>, %arg4: memref<8x2xf32, #tpu.memory_space<vmem>>, %arg5: memref<8x1xf32, #tpu.memory_space<vmem>>, %arg6: memref<1x8x256xf32, #tpu.memory_space<vmem>>, %arg7: memref<8x512xf32, #tpu.memory_space<vmem>>, %arg8: memref<8x512xf32, #tpu.memory_space<vmem>>) attributes {dimension_semantics = [#tpu.dimension_semantics<parallel>], iteration_bounds = array<i64: 2>, scalar_prefetch = 0 : i64, scratch_operands = 2 : i64, tpu.core_type = #tpu.core_type<tc>, window_params = [{transform_indices = @transform_0, window_bounds = array<i64: 1, 8, 256>}, {pipeline_mode = #tpu.pipeline_mode<synchronous>, transform_indices = @transform_1, window_bounds = array<i64: 8, 2>}, {pipeline_mode = #tpu.pipeline_mode<synchronous>, transform_indices = @transform_2, window_bounds = array<i64: 1, 2>}, {pipeline_mode = #tpu.pipeline_mode<synchronous>, transform_indices = @transform_3, window_bounds = array<i64: 8, 2>}, {pipeline_mode = #tpu.pipeline_mode<synchronous>, transform_indices = @transform_4, window_bounds = array<i64: 8, 1>}, {transform_indices = @transform_5, window_bounds = array<i64: 1, 8, 256>}]} {
    %cst = arith.constant 0.000000e+00 : f32
    %0 = vector.broadcast %cst : f32 to vector<8x512xf32>
    %c0 = arith.constant 0 : index
    %c0_0 = arith.constant 0 : index
    %1 = vector.load %arg7[%c0, %c0_0] : memref<8x512xf32, #tpu.memory_space<vmem>>, vector<8x512xf32>
    tpu.vector_store %arg7[%c0, %c0_0], %0 {strides = array<i32>} : memref<8x512xf32, #tpu.memory_space<vmem>>, vector<8x512xf32>,
    %cst_1 = arith.constant 0xFF800000 : f32
    %2 = vector.broadcast %cst_1 : f32 to vector<8x512xf32>
    %c0_2 = arith.constant 0 : index
    %c0_3 = arith.constant 0 : index
    %3 = vector.load %arg8[%c0_2, %c0_3] : memref<8x512xf32, #tpu.memory_space<vmem>>, vector<8x512xf32>
    tpu.vector_store %arg8[%c0_2, %c0_3], %2 {strides = array<i32>} : memref<8x512xf32, #tpu.memory_space<vmem>>, vector<8x512xf32>,
    %c0_4 = arith.constant 0 : index
    %c0_5 = arith.constant 0 : index
    %4 = vector.load %arg7[%c0_4, %c0_5] : memref<8x512xf32, #tpu.memory_space<vmem>>, vector<8x512xf32>
    %cst_6 = arith.constant dense<0.000000e+00> : vector<8xf32>
    %5 = vector.multi_reduction <add>, %4, %cst_6 [1] : vector<8x512xf32> to vector<8xf32>
    %6 = vector.shape_cast %5 : vector<8xf32> to vector<8x1xf32>
    %c0_7 = arith.constant 0 : index
    %c0_8 = arith.constant 0 : index
    %7 = vector.load %arg8[%c0_7, %c0_8] : memref<8x512xf32, #tpu.memory_space<vmem>>, vector<8x512xf32>
    %cst_9 = arith.constant dense<0xFF800000> : vector<8xf32>
    %8 = vector.multi_reduction <maximumf>, %7, %cst_9 [1] : vector<8x512xf32> to vector<8xf32>
    %9 = vector.shape_cast %8 : vector<8xf32> to vector<8x1xf32>
    %c0_10 = arith.constant 0 : index
    %c0_11 = arith.constant 0 : index
    %c0_12 = arith.constant 0 : index
    %10 = vector.load %arg1[%c0_10, %c0_11, %c0_12] : memref<1x8x256xf32, #tpu.memory_space<vmem>>, vector<1x8x256xf32>
    %11 = vector.shape_cast %10 : vector<1x8x256xf32> to vector<8x256xf32>
    %cst_13 = arith.constant dense<0.000000e+00> : vector<8xf32>
    %12 = vector.multi_reduction <add>, %11, %cst_13 [1] : vector<8x256xf32> to vector<8xf32>
    %13 = vector.shape_cast %12 : vector<8xf32> to vector<8x1xf32>
    %14 = arith.addf %6, %13 : vector<8x1xf32>
    %cst_14 = arith.constant dense<0xFF800000> : vector<8xf32>
    %15 = vector.multi_reduction <maximumf>, %11, %cst_14 [1] : vector<8x256xf32> to vector<8xf32>
    %16 = vector.shape_cast %15 : vector<8xf32> to vector<8x1xf32>
    %17 = arith.maximumf %9, %16 : vector<8x1xf32>
    %cst_15 = arith.constant 3.906250e-03 : f32
    %18 = vector.broadcast %cst_15 : f32 to vector<8x1xf32>
    %19 = arith.mulf %14, %18 : vector<8x1xf32>
    %c0_16 = arith.constant 0 : index
    %c0_17 = arith.constant 0 : index
    %20 = vector.load %arg2[%c0_16, %c0_17] : memref<8x2xf32, #tpu.memory_space<vmem>>, vector<8x2xf32>
    %c0_18 = arith.constant 0 : index
    %c0_19 = arith.constant 0 : index
    %21 = vector.load %arg3[%c0_18, %c0_19] : memref<1x2xf32, #tpu.memory_space<vmem>>, vector<1x2xf32>
    %c0_20 = arith.constant 0 : index
    %c0_21 = arith.constant 0 : index
    %22 = vector.load %arg4[%c0_20, %c0_21] : memref<8x2xf32, #tpu.memory_space<vmem>>, vector<8x2xf32>
    %c0_22 = arith.constant 0 : index
    %c0_23 = arith.constant 0 : index
    %23 = vector.load %arg5[%c0_22, %c0_23] : memref<8x1xf32, #tpu.memory_space<vmem>>, vector<8x1xf32>
    %24 = vector.broadcast %19 : vector<8x1xf32> to vector<8x2xf32>
    %25 = arith.mulf %20, %24 : vector<8x2xf32>
    %cst_24 = arith.constant dense<0.000000e+00> : vector<2xf32>
    %26 = vector.multi_reduction <add>, %25, %cst_24 [0] : vector<8x2xf32> to vector<2xf32>
    %27 = vector.shape_cast %26 : vector<2xf32> to vector<1x2xf32>
    %28 = arith.addf %27, %21 : vector<1x2xf32>
    %cst_25 = arith.constant 0.000000e+00 : f32
    %29 = vector.broadcast %cst_25 : f32 to vector<1x2xf32>
    %30 = arith.maximumf %28, %29 : vector<1x2xf32>
    %31 = vector.broadcast %30 : vector<1x2xf32> to vector<8x2xf32>
    %32 = arith.mulf %22, %31 : vector<8x2xf32>
    %cst_26 = arith.constant dense<0.000000e+00> : vector<8xf32>
    %33 = vector.multi_reduction <add>, %32, %cst_26 [1] : vector<8x2xf32> to vector<8xf32>
    %34 = vector.shape_cast %33 : vector<8xf32> to vector<8x1xf32>
    %35 = arith.addf %34, %23 : vector<8x1xf32>
    %36 = arith.negf %35 : vector<8x1xf32>
    %37 = math.exp %36 : vector<8x1xf32>
    %cst_27 = arith.constant 1.000000e+00 : f32
    %38 = vector.broadcast %cst_27 : f32 to vector<8x1xf32>
    %39 = arith.addf %38, %37 : vector<8x1xf32>
    %40 = arith.divf %38, %39 : vector<8x1xf32>
    %41 = vector.broadcast %17 : vector<8x1xf32> to vector<8x2xf32>
    %42 = arith.mulf %20, %41 : vector<8x2xf32>
    %cst_28 = arith.constant dense<0.000000e+00> : vector<2xf32>
    %43 = vector.multi_reduction <add>, %42, %cst_28 [0] : vector<8x2xf32> to vector<2xf32>
    %44 = vector.shape_cast %43 : vector<2xf32> to vector<1x2xf32>
    %45 = arith.addf %44, %21 : vector<1x2xf32>
    %cst_29 = arith.constant 0.000000e+00 : f32
    %46 = vector.broadcast %cst_29 : f32 to vector<1x2xf32>
    %47 = arith.maximumf %45, %46 : vector<1x2xf32>
    %48 = vector.broadcast %47 : vector<1x2xf32> to vector<8x2xf32>
    %49 = arith.mulf %22, %48 : vector<8x2xf32>
    %cst_30 = arith.constant dense<0.000000e+00> : vector<8xf32>
    %50 = vector.multi_reduction <add>, %49, %cst_30 [1] : vector<8x2xf32> to vector<8xf32>
    %51 = vector.shape_cast %50 : vector<8xf32> to vector<8x1xf32>
    %52 = arith.addf %51, %23 : vector<8x1xf32>
    %53 = arith.negf %52 : vector<8x1xf32>
    %54 = math.exp %53 : vector<8x1xf32>
    %cst_31 = arith.constant 1.000000e+00 : f32
    %55 = vector.broadcast %cst_31 : f32 to vector<8x1xf32>
    %56 = arith.addf %55, %54 : vector<8x1xf32>
    %57 = arith.divf %55, %56 : vector<8x1xf32>
    %58 = arith.addf %40, %57 : vector<8x1xf32>
    %c0_32 = arith.constant 0 : index
    %c0_33 = arith.constant 0 : index
    %c0_34 = arith.constant 0 : index
    %59 = vector.load %arg1[%c0_32, %c0_33, %c0_34] : memref<1x8x256xf32, #tpu.memory_space<vmem>>, vector<1x8x256xf32>
    %60 = vector.shape_cast %59 : vector<1x8x256xf32> to vector<8x256xf32>
    %61 = vector.broadcast %58 : vector<8x1xf32> to vector<8x256xf32>
    %62 = arith.mulf %60, %61 : vector<8x256xf32>
    %c0_35 = arith.constant 0 : index
    %c0_36 = arith.constant 0 : index
    %c0_37 = arith.constant 0 : index
    %63 = vector.load %arg6[%c0_35, %c0_36, %c0_37] : memref<1x8x256xf32, #tpu.memory_space<vmem>>, vector<1x8x256xf32>
    %64 = vector.shape_cast %63 : vector<1x8x256xf32> to vector<8x256xf32>
    %65 = vector.shape_cast %62 : vector<8x256xf32> to vector<1x8x256xf32>
    tpu.vector_store %arg6[%c0_35, %c0_36, %c0_37], %65 {strides = array<i32>} : memref<1x8x256xf32, #tpu.memory_space<vmem>>, vector<1x8x256xf32>,
    return
  }
  func.func @transform_0(%arg0: i32) -> (i32, i32, i32) {
    %c0_i32 = arith.constant 0 : i32
    %c0_i32_0 = arith.constant 0 : i32
    %c0_i32_1 = arith.constant 0 : i32
    return %arg0, %c0_i32, %c0_i32_0 : i32, i32, i32
  }
  func.func @transform_1(%arg0: i32) -> (i32, i32) {
    %c0_i32 = arith.constant 0 : i32
    %c0_i32_0 = arith.constant 0 : i32
    %c0_i32_1 = arith.constant 0 : i32
    return %c0_i32, %c0_i32_0 : i32, i32
  }
  func.func @transform_2(%arg0: i32) -> (i32, i32) {
    %c0_i32 = arith.constant 0 : i32
    %c0_i32_0 = arith.constant 0 : i32
    %c0_i32_1 = arith.constant 0 : i32
    return %c0_i32, %c0_i32_0 : i32, i32
  }
  func.func @transform_3(%arg0: i32) -> (i32, i32) {
    %c0_i32 = arith.constant 0 : i32
    %c0_i32_0 = arith.constant 0 : i32
    %c0_i32_1 = arith.constant 0 : i32
    return %c0_i32, %c0_i32_0 : i32, i32
  }
  func.func @transform_4(%arg0: i32) -> (i32, i32) {
    %c0_i32 = arith.constant 0 : i32
    %c0_i32_0 = arith.constant 0 : i32
    %c0_i32_1 = arith.constant 0 : i32
    return %c0_i32, %c0_i32_0 : i32, i32
  }
  func.func @transform_5(%arg0: i32) -> (i32, i32, i32) {
    %c0_i32 = arith.constant 0 : i32
    %c0_i32_0 = arith.constant 0 : i32
    %c0_i32_1 = arith.constant 0 : i32
    return %arg0, %c0_i32, %c0_i32_0 : i32, i32, i32
  }
}

</mosaic_0001>

<llo_original>
// kernel: tpu_custom_call.1
$region0: #{tpu_custom_call.1}
  #allocation0 [shape = 'u32[]', space=smem, size = 0x4, offset = 0x4, fixed_abs, tag = 'smem constant byte address 0x4 - core index']
  #allocation1 [shape = 'u32[72,128]{1,0:T(1,128)}', space=vmem, size = 0x9000, scoped, tag = 'internal scratch']
  #allocation2 [shape = 'f32[8,512]{1,0:T(8,128)}', space=vmem, size = 0x4000, scoped, tag = 'scratch operand']
  #allocation3 [shape = 'f32[8,512]{1,0:T(8,128)}', space=vmem, size = 0x4000, scoped, tag = 'scratch operand']
  %s0 = inlined_call_operand.hbm [shape: f32[2,8,256], index: 0, kind: input, shape index: {}]
  %s1 = inlined_call_operand.vmem [shape: f32[8,2], index: 1, kind: input, shape index: {}]
  %s2 = inlined_call_operand.vmem [shape: f32[1,2], index: 2, kind: input, shape index: {}]
  %s3 = inlined_call_operand.vmem [shape: f32[8,2], index: 3, kind: input, shape index: {}]
  %s4 = inlined_call_operand.vmem [shape: f32[8,1], index: 4, kind: input, shape index: {}]
  %s5 = inlined_call_operand.hbm [shape: f32[2,8,256], index: 5, kind: output, shape index: {}]
  %s6 = sld [smem:[#allocation0]]
  $region57: #{tpu_custom_call.1} parent=0
    _
  %s8 = ssub.s32 1, %s6
  %s9 = scalar_select 0, %s8, %s6
  $region1: #{tpu_custom_call.1} parent=0
    #allocation4 [shape = 'u8[16384]{0}', space=vmem, size = 0x4000, scoped, tag = 'input window, operand 0']
    #allocation5 [shape = 's32[2]{0}', space=sflag, size = 0x8, scoped, tag = 'scoped memory for tpu_custom_call.1']
    #allocation6 [shape = 's32[2]{0}', space=sflag, size = 0x8, scoped, tag = 'scoped memory for tpu_custom_call.1']
    #allocation7 [shape = 'u8[16384]{0}', space=vmem, size = 0x4000, scoped, tag = 'output window, operand 0']
    %10 = vsyncpa [#allocation5], 0
    %s11 = scalar_lea.sflag [#allocation5], 1
    %12 = vsyncpa %s11, 0
    %13 = vsyncpa [#allocation6], 0
    %s14 = scalar_lea.sflag [#allocation6], 1
    %15 = vsyncpa %s14, 0
    loop: start=0, step=1, limit=4
    $region2: #{tpu_custom_call.1} parent=1 // loop_pre_header
      _
    $region3: #{tpu_custom_call.1} parent=1 // loop_header
      %s17 = sphi 0, %s21
      %p18 = scmp.ge.s32.totalorder %s17, 4
      %s27 = sphi 0, %s29
      %s30 = sphi 0, %s27
      %s31 = sphi 0, %s30
      %s47 = sphi 0, %s31
      %s51 = sphi 0, %s51
      %s53 = sphi 0, %s51
      %s54 = sphi 0, %s53
      %s68 = sphi 0, %s54
      %s72 = sphi 0, %s72
      %s74 = sphi 0, %s72
      %s75 = sphi 0, %s74
      %s89 = sphi 0, %s75
      %s93 = sphi 0, %s93
      %s95 = sphi 0, %s93
      %s96 = sphi 0, %s95
      %s110 = sphi 0, %s96
      %s114 = sphi 0, %s114
      %s116 = sphi 0, %s114
      %s117 = sphi 0, %s116
      %s131 = sphi 0, %s117
      %s137 = sphi 0, %s139
      %s140 = sphi 0, %s137
      %s141 = sphi 0, %s140
      %s157 = sphi 0, %s141
    $region4: #{tpu_custom_call.1} parent=1 // loop_header_branch
      %20 = sbr.rel (%p18) target = $region8
    $region5: #{tpu_custom_call.1} parent=1 // loop_body
      %s22 = ssub.s32 %s17, 1
      %s23 = ssub.s32 %s17, 2
      %s24 = sadd.s32 %s17, 1
      %s25 = ssub.s32 %s17, %s24
      %p26 = scmp.eq.s32.totalorder %s25, 0
      %s28 = sadd.s32 %s27, 1
      %s29 = scalar_select %p26, %s27, %s28
      %p32 = pneg %p26
      %p33 = scmp.eq.s32.totalorder %s17, 1
      %p34 = por %p32, %p33
      %p35 = scmp.ne.s32.totalorder %s27, %s30
      %p36 = scmp.eq.s32.totalorder %s17, 0
      %p37 = por %p35, %p36
      %p38 = scmp.ne.s32.totalorder %s27, %s30
      %p39 = scmp.eq.s32.totalorder %s22, 1
      %p40 = por %p38, %p39
      %p41 = scmp.ne.s32.totalorder %s30, %s31
      %p42 = scmp.eq.s32.totalorder %s22, 0
      %p43 = por %p41, %p42
      %p44 = scmp.ne.s32.totalorder %s30, %s31
      %p45 = scmp.eq.s32.totalorder %s23, 1
      %p46 = por %p44, %p45
      %p48 = scmp.ne.s32.totalorder %s31, %s47
      %p49 = scmp.eq.s32.totalorder %s23, 0
      %p50 = por %p48, %p49
      %s52 = sadd.s32 %s51, 1
      %p55 = scmp.eq.s32.totalorder %s17, 1
      %p56 = scmp.ne.s32.totalorder %s51, %s53
      %p57 = scmp.eq.s32.totalorder %s17, 0
      %p58 = por %p56, %p57
      %p59 = scmp.ne.s32.totalorder %s51, %s53
      %p60 = scmp.eq.s32.totalorder %s22, 1
      %p61 = por %p59, %p60
      %p62 = scmp.ne.s32.totalorder %s53, %s54
      %p63 = scmp.eq.s32.totalorder %s22, 0
      %p64 = por %p62, %p63
      %p65 = scmp.ne.s32.totalorder %s53, %s54
      %p66 = scmp.eq.s32.totalorder %s23, 1
      %p67 = por %p65, %p66
      %p69 = scmp.ne.s32.totalorder %s54, %s68
      %p70 = scmp.eq.s32.totalorder %s23, 0
      %p71 = por %p69, %p70
      %s73 = sadd.s32 %s72, 1
      %p76 = scmp.eq.s32.totalorder %s17, 1
      %p77 = scmp.ne.s32.totalorder %s72, %s74
      %p78 = scmp.eq.s32.totalorder %s17, 0
      %p79 = por %p77, %p78
      %p80 = scmp.ne.s32.totalorder %s72, %s74
      %p81 = scmp.eq.s32.totalorder %s22, 1
      %p82 = por %p80, %p81
      %p83 = scmp.ne.s32.totalorder %s74, %s75
      %p84 = scmp.eq.s32.totalorder %s22, 0
      %p85 = por %p83, %p84
      %p86 = scmp.ne.s32.totalorder %s74, %s75
      %p87 = scmp.eq.s32.totalorder %s23, 1
      %p88 = por %p86, %p87
      %p90 = scmp.ne.s32.totalorder %s75, %s89
      %p91 = scmp.eq.s32.totalorder %s23, 0
      %p92 = por %p90, %p91
      %s94 = sadd.s32 %s93, 1
      %p97 = scmp.eq.s32.totalorder %s17, 1
      %p98 = scmp.ne.s32.totalorder %s93, %s95
      %p99 = scmp.eq.s32.totalorder %s17, 0
      %p100 = por %p98, %p99
      %p101 = scmp.ne.s32.totalorder %s93, %s95
      %p102 = scmp.eq.s32.totalorder %s22, 1
      %p103 = por %p101, %p102
      %p104 = scmp.ne.s32.totalorder %s95, %s96
      %p105 = scmp.eq.s32.totalorder %s22, 0
      %p106 = por %p104, %p105
      %p107 = scmp.ne.s32.totalorder %s95, %s96
      %p108 = scmp.eq.s32.totalorder %s23, 1
      %p109 = por %p107, %p108
      %p111 = scmp.ne.s32.totalorder %s96, %s110
      %p112 = scmp.eq.s32.totalorder %s23, 0
      %p113 = por %p111, %p112
      %s115 = sadd.s32 %s114, 1
      %p118 = scmp.eq.s32.totalorder %s17, 1
      %p119 = scmp.ne.s32.totalorder %s114, %s116
      %p120 = scmp.eq.s32.totalorder %s17, 0
      %p121 = por %p119, %p120
      %p122 = scmp.ne.s32.totalorder %s114, %s116
      %p123 = scmp.eq.s32.totalorder %s22, 1
      %p124 = por %p122, %p123
      %p125 = scmp.ne.s32.totalorder %s116, %s117
      %p126 = scmp.eq.s32.totalorder %s22, 0
      %p127 = por %p125, %p126
      %p128 = scmp.ne.s32.totalorder %s116, %s117
      %p129 = scmp.eq.s32.totalorder %s23, 1
      %p130 = por %p128, %p129
      %p132 = scmp.ne.s32.totalorder %s117, %s131
      %p133 = scmp.eq.s32.totalorder %s23, 0
      %p134 = por %p132, %p133
      %s135 = ssub.s32 %s17, %s24
      %p136 = scmp.eq.s32.totalorder %s135, 0
      %s138 = sadd.s32 %s137, 1
      %s139 = scalar_select %p136, %s137, %s138
      %p142 = pneg %p136
      %p143 = scmp.eq.s32.totalorder %s17, 1
      %p144 = por %p142, %p143
      %p145 = scmp.ne.s32.totalorder %s137, %s140
      %p146 = scmp.eq.s32.totalorder %s17, 0
      %p147 = por %p145, %p146
      %p148 = scmp.ne.s32.totalorder %s137, %s140
      %p149 = scmp.eq.s32.totalorder %s22, 1
      %p150 = por %p148, %p149
      %p151 = scmp.ne.s32.totalorder %s140, %s141
      %p152 = scmp.eq.s32.totalorder %s22, 0
      %p153 = por %p151, %p152
      %p154 = scmp.ne.s32.totalorder %s140, %s141
      %p155 = scmp.eq.s32.totalorder %s23, 1
      %p156 = por %p154, %p155
      %p158 = scmp.ne.s32.totalorder %s141, %s157
      %p159 = scmp.eq.s32.totalorder %s23, 0
      %p160 = por %p158, %p159
      %p161 = scmp.le.s32.totalorder 1, %s17
      %p162 = scmp.lt.s32.totalorder %s17, 3
      %p163 = pnand %p161, %p162
      %p164 = pneg %p163
      // Predicated region
      $region9: #{tpu_custom_call.1} parent=5 // pred_check
        _
      $region10: #{tpu_custom_call.1} parent=5 // pred_check_branch
        %166 = sbr.rel (%p163) target = $region12
      $region11: #{tpu_custom_call.1} parent=5 // pred_region
        %s167 = ssub.s32 %s17, 1
        // Predicated region
        $region13: #{tpu_custom_call.1} parent=11 // pred_check
          %p168 = pneg %p64
        $region14: #{tpu_custom_call.1} parent=11 // pred_check_branch
          %170 = sbr.rel (%p168) target = $region16
        $region15: #{tpu_custom_call.1} parent=11 // pred_region
          _
        $region16: #{tpu_custom_call.1} parent=11 // pred_fallthru
          _
        // Predicated region
        $region17: #{tpu_custom_call.1} parent=11 // pred_check
          %p171 = pneg %p85
        $region18: #{tpu_custom_call.1} parent=11 // pred_check_branch
          %173 = sbr.rel (%p171) target = $region20
        $region19: #{tpu_custom_call.1} parent=11 // pred_region
          _
        $region20: #{tpu_custom_call.1} parent=11 // pred_fallthru
          _
        // Predicated region
        $region21: #{tpu_custom_call.1} parent=11 // pred_check
          %p174 = pneg %p106
        $region22: #{tpu_custom_call.1} parent=11 // pred_check_branch
          %176 = sbr.rel (%p174) target = $region24
        $region23: #{tpu_custom_call.1} parent=11 // pred_region
          _
        $region24: #{tpu_custom_call.1} parent=11 // pred_fallthru
          _
        // Predicated region
        $region25: #{tpu_custom_call.1} parent=11 // pred_check
          %p177 = pneg %p127
        $region26: #{tpu_custom_call.1} parent=11 // pred_check_branch
          %179 = sbr.rel (%p177) target = $region28
        $region27: #{tpu_custom_call.1} parent=11 // pred_region
          _
        $region28: #{tpu_custom_call.1} parent=11 // pred_fallthru
          _
      $region12: #{tpu_custom_call.1} parent=5 // pred_fallthru
        _
      %p180 = scmp.lt.s32.totalorder %s17, 2
      // Predicated region
      $region29: #{tpu_custom_call.1} parent=5 // pred_check
        %p181 = pneg %p180
      $region30: #{tpu_custom_call.1} parent=5 // pred_check_branch
        %183 = sbr.rel (%p181) target = $region32
      $region31: #{tpu_custom_call.1} parent=5 // pred_region
        // Predicated region
        $region33: #{tpu_custom_call.1} parent=31 // pred_check
          %p184 = pneg %p37
        $region34: #{tpu_custom_call.1} parent=31 // pred_check_branch
          %186 = sbr.rel (%p184) target = $region36
        $region35: #{tpu_custom_call.1} parent=31 // pred_region
          %s187 = sand.u32 %s27, 1
          %s188 = scalar_lea.sflag [#allocation5], %s187
          %s189 = sand.u32 %s27, 1
          %s190 = smul.addr %s189, 16
          %s191 = scalar_lea.vmem [#allocation4], %s190
          %193 = vsyncadd %s188, 0
          %s194 = smul.addr %s17, 2
          %s195 = smul.addr %s194, 8
          %s196 = scalar_lea.hbm %s0, %s195
          %s198 = sshll.u32 %s196, 4
          %s199 = int_to_ptr.hbm [resolvable:$true] %s198
          %s200 = sshll.u32 %s191, 4
          %s201 = int_to_ptr.vmem [resolvable:$true] %s200
          %203 = dma.hbm_to_vmem [thread:$0]  %s199, 256, %s201, %s188
        $region36: #{tpu_custom_call.1} parent=31 // pred_fallthru
          _
      $region32: #{tpu_custom_call.1} parent=5 // pred_fallthru
        _
      %p204 = scmp.le.s32.totalorder 1, %s17
      %p205 = scmp.lt.s32.totalorder %s17, 3
      %p206 = pnand %p204, %p205
      %p207 = pneg %p206
      // Predicated region
      $region37: #{tpu_custom_call.1} parent=5 // pred_check
        _
      $region38: #{tpu_custom_call.1} parent=5 // pred_check_branch
        %209 = sbr.rel (%p206) target = $region40
      $region39: #{tpu_custom_call.1} parent=5 // pred_region
        %s210 = ssub.s32 %s17, 1
        %s211 = sand.u32 %s30, 1
        %s212 = scalar_lea.sflag [#allocation5], %s211
        %s213 = sand.u32 %s30, 1
        %s214 = smul.addr %s213, 16
        %s215 = scalar_lea.vmem [#allocation4], %s214
        // Predicated region
        $region41: #{tpu_custom_call.1} parent=39 // pred_check
          %p216 = pneg %p43
        $region42: #{tpu_custom_call.1} parent=39 // pred_check_branch
          %218 = sbr.rel (%p216) target = $region44
        $region43: #{tpu_custom_call.1} parent=39 // pred_region
          %220 = dma.done %s212, 256
        $region44: #{tpu_custom_call.1} parent=39 // pred_fallthru
          _
        %s221 = sand.u32 %s30, 1
        %s222 = scalar_lea.sflag [#allocation5], %s221
        %s223 = sand.u32 %s30, 1
        %s224 = smul.addr %s223, 16
        %s225 = scalar_lea.vmem [#allocation4], %s224
        %p226 = pneg %p43
        %p227 = pneg %p40
        %p228 = pneg %p64
        %p229 = pneg %p61
        %p230 = pneg %p85
        %p231 = pneg %p82
        %p232 = pneg %p106
        %p233 = pneg %p103
        %p234 = pneg %p127
        %p235 = pneg %p124
        %p236 = pneg %p153
        %p237 = pneg %p150
        %s238 = sand.u32 %s140, 1
        %s239 = scalar_lea.sflag [#allocation6], %s238
        %s240 = sand.u32 %s140, 1
        %s241 = smul.addr %s240, 16
        %s242 = scalar_lea.vmem [#allocation7], %s241
        %243 = vst [vmem:[#allocation2] sm:$0xff] 0.0
        %244 = vst [vmem:[#allocation2 + $0x8] sm:$0xff] 0.0
        %245 = vst [vmem:[#allocation2 + $0x10] sm:$0xff] 0.0
        %246 = vst [vmem:[#allocation2 + $0x18] sm:$0xff] 0.0
        %247 = vst [vmem:[#allocation3] sm:$0xff] -inf
        %248 = vst [vmem:[#allocation3 + $0x8] sm:$0xff] -inf
        %249 = vst [vmem:[#allocation3 + $0x10] sm:$0xff] -inf
        %250 = vst [vmem:[#allocation3 + $0x18] sm:$0xff] -inf
        %v251 = vld [vmem:[#allocation2] sm:$0xff]
        %v252 = vld [vmem:[#allocation2 + $0x8] sm:$0xff]
        %v253 = vld [vmem:[#allocation2 + $0x10] sm:$0xff]
        %v254 = vld [vmem:[#allocation2 + $0x18] sm:$0xff]
        %v255 = vadd.f32 %v251, %v252
        %v256 = vadd.f32 %v255, %v253
        %v257 = vadd.f32 %v256, %v254
        %258 = vadd.xlane.f32.xlu0 %v257
        %v259 = vpop.xlane.xlu0 %258
        %v260 = vld [vmem:[#allocation3] sm:$0xff]
        %v261 = vld [vmem:[#allocation3 + $0x8] sm:$0xff]
        %v262 = vld [vmem:[#allocation3 + $0x10] sm:$0xff]
        %v263 = vld [vmem:[#allocation3 + $0x18] sm:$0xff]
        %v264 = vmax.f32 %v260, %v261
        %v265 = vmax.f32 %v262, %v263
        %v266 = vmax.f32 %v264, %v265
        %267 = vmax.xlane.f32.xlu0 %v266
        %v268 = vpop.xlane.xlu0 %267
        %v269 = vld [vmem:[%s215] sm:$0xff]
        %v270 = vld [vmem:[%s215 + $0x8] sm:$0xff]
        %v271 = vadd.f32 %v269, %v270
        %272 = vadd.xlane.f32.xlu0 %v271
        %v273 = vpop.xlane.xlu0 %272
        %v274 = vadd.f32 %v259, %v273
        %v275 = vmax.f32 %v269, %v270
        %276 = vmax.xlane.f32.xlu0 %v275
        %v277 = vpop.xlane.xlu0 %276
        %v278 = vmax.f32 %v268, %v277
        %v279 = vmul.f32 %v274, 0.00390625
        %v280 = vld [vmem:[%s1] sm:$0xff]
        %v281 = vld [vmem:[%s2] sm:$0x1]
        %v282 = vld [vmem:[%s3] sm:$0xff]
        %v283 = vld [vmem:[%s4] sm:$0xff]
        %v284 = vmul.f32 %v280, %v279
        %vm285 = vcmask 15360
        %v286 = vsel %vm285, %v284, 0.0
        %v287 = vrot.slane %v286, 4
        %v288 = vadd.f32 %v286, %v287
        %v289 = vrot.slane %v288, 2
        %v290 = vadd.f32 %v288, %v289
        %v291 = vrot.slane %v290, 1
        %v292 = vadd.f32 %v290, %v291
        %v293 = vadd.f32 %v292, %v281
        %v294 = vmax.f32 %v293, 0.0
        %v295 = vperm.slane %v294, 0
        %v296 = vmul.f32 %v282, %v295
        %v297 = vsel %vm285, %v296, 0.0
        %298 = vadd.xlane.f32.xlu0 %v297
        %v299 = vpop.xlane.xlu0 %298
        %v300 = vadd.f32 %v299, %v283
        %v301 = vxor.u32 %v300, 2147483648
        %v302 = vmul.f32 %v301, 1.442695
        %v303 = vpow.pop %v302
        %v304 = vadd.f32 %v303, 1.0
        %v305 = vrcp.pop %v304
        %v306 = vmul.f32 %v304, %v305
        %v307 = vsub.f32 1.0, %v306
        %v308 = vmul.f32 %v305, %v307
        %v309 = vadd.f32 %v305, %v308
        %vm310 = vweird.f32 %v304
        %vm311 = vweird.f32 %v305
        %vm312 = vmor %vm310, %vm311
        %v313 = vsel %vm312, %v305, %v309
        %v314 = vand.u32 2147483647, %v304
        %vm315 = vcmp.eq.f32.partialorder %v314, 8.507059e+37
        %v316 = vand.u32 %v304, 2147483648
        %v317 = vor.u32 1.1754944e-38, %v316
        %v318 = vsel %vm315, %v317, %v313
        %v319 = vmul.f32 1.0, %v318
        %v320 = vmul.f32 %v280, %v278
        %v321 = vsel %vm285, %v320, 0.0
        %v322 = vrot.slane %v321, 4
        %v323 = vadd.f32 %v321, %v322
        %v324 = vrot.slane %v323, 2
        %v325 = vadd.f32 %v323, %v324
        %v326 = vrot.slane %v325, 1
        %v327 = vadd.f32 %v325, %v326
        %v328 = vadd.f32 %v327, %v281
        %v329 = vmax.f32 %v328, 0.0
        %v330 = vperm.slane %v329, 0
        %v331 = vmul.f32 %v282, %v330
        %v332 = vsel %vm285, %v331, 0.0
        %333 = vadd.xlane.f32.xlu0 %v332
        %v334 = vpop.xlane.xlu0 %333
        %v335 = vadd.f32 %v334, %v283
        %v336 = vxor.u32 %v335, 2147483648
        %v337 = vmul.f32 %v336, 1.442695
        %v338 = vpow.pop %v337
        %v339 = vadd.f32 %v338, 1.0
        %v340 = vrcp.pop %v339
        %v341 = vmul.f32 %v339, %v340
        %v342 = vsub.f32 1.0, %v341
        %v343 = vmul.f32 %v340, %v342
        %v344 = vadd.f32 %v340, %v343
        %vm345 = vweird.f32 %v339
        %vm346 = vweird.f32 %v340
        %vm347 = vmor %vm345, %vm346
        %v348 = vsel %vm347, %v340, %v344
        %v349 = vand.u32 2147483647, %v339
        %vm350 = vcmp.eq.f32.partialorder %v349, 8.507059e+37
        %v351 = vand.u32 %v339, 2147483648
        %v352 = vor.u32 1.1754944e-38, %v351
        %v353 = vsel %vm350, %v352, %v348
        %v354 = vmul.f32 1.0, %v353
        %v355 = vadd.f32 %v319, %v354
        %357 = vset.pattern.permute.xlu0 0
        %358 = vperm.xlu0 %357, %v355
        %v359 = vpop.permute.xlu0 %358
        %v361 = vmul.f32 %v269, %v359
        %v362 = vmul.f32 %v270, %v359
        %363 = vst [vmem:[%s242] sm:$0xff] %v361
        %364 = vst [vmem:[%s242 + $0x8] sm:$0xff] %v362
        %s365 = sand.u32 %s140, 1
        %s366 = scalar_lea.sflag [#allocation6], %s365
        %s367 = sand.u32 %s140, 1
        %s368 = smul.addr %s367, 16
        %s369 = scalar_lea.vmem [#allocation7], %s368
        // Predicated region
        $region45: #{tpu_custom_call.1} parent=39 // pred_check
          %p370 = pneg %p150
        $region46: #{tpu_custom_call.1} parent=39 // pred_check_branch
          %372 = sbr.rel (%p370) target = $region48
        $region47: #{tpu_custom_call.1} parent=39 // pred_region
          %374 = vsyncadd %s366, 0
          %s375 = smul.addr %s22, 2
          %s376 = smul.addr %s375, 8
          %s377 = scalar_lea.hbm %s5, %s376
          %s379 = sshll.u32 %s369, 4
          %s380 = int_to_ptr.vmem [resolvable:$true] %s379
          %s381 = sshll.u32 %s377, 4
          %s382 = int_to_ptr.hbm [resolvable:$true] %s381
          %384 = dma.vmem_to_hbm [thread:$0]  %s380, 256, %s382, %s366
        $region48: #{tpu_custom_call.1} parent=39 // pred_fallthru
          _
      $region40: #{tpu_custom_call.1} parent=5 // pred_fallthru
        _
      %p385 = scmp.le.s32.totalorder 2, %s17
      // Predicated region
      $region49: #{tpu_custom_call.1} parent=5 // pred_check
        %p386 = pneg %p385
      $region50: #{tpu_custom_call.1} parent=5 // pred_check_branch
        %388 = sbr.rel (%p386) target = $region52
      $region51: #{tpu_custom_call.1} parent=5 // pred_region
        %s389 = ssub.s32 %s17, 2
        // Predicated region
        $region53: #{tpu_custom_call.1} parent=51 // pred_check
          %p390 = pneg %p156
        $region54: #{tpu_custom_call.1} parent=51 // pred_check_branch
          %392 = sbr.rel (%p390) target = $region56
        $region55: #{tpu_custom_call.1} parent=51 // pred_region
          %s393 = sand.u32 %s141, 1
          %s394 = scalar_lea.sflag [#allocation6], %s393
          %s395 = sand.u32 %s141, 1
          %s396 = smul.addr %s395, 16
          %s397 = scalar_lea.vmem [#allocation7], %s396
          %399 = dma.done %s394, 256
        $region56: #{tpu_custom_call.1} parent=51 // pred_fallthru
          _
      $region52: #{tpu_custom_call.1} parent=5 // pred_fallthru
        _
    $region6: #{tpu_custom_call.1} parent=1 // loop_footer
      %s21 = sadd.s32 1, %s17
    $region7: #{tpu_custom_call.1} parent=1 // loop_footer_branch
      %16 = sbr.rel target = $region3
    $region8: #{tpu_custom_call.1} parent=1 // loop_exit
      _
    %400 = vsyncpa [#allocation5], 1
    %s401 = scalar_lea.sflag [#allocation5], 1
    %402 = vsyncpa %s401, 1
    %403 = vsyncpa [#allocation6], 1
    %s404 = scalar_lea.sflag [#allocation6], 1
    %405 = vsyncpa %s404, 1

</llo_original>
